<compile_context>
chip_gen: v6e
topology: v6e:2x2x1
jax: 0.10.0
libtpu: 0.0.40
codegen_flags: <defaults>
</compile_context>

<pallas_src>
import jax
import jax.numpy as jnp
from jax.experimental import pallas as pl
from jax.experimental.pallas import tpu as pltpu


# --------------------------------------------------------------------------
# Fused squeeze-excitation kernel (one grid step == one batch element)
# --------------------------------------------------------------------------
def _se_kernel(x_ref, w1_ref, b1_ref, w2_ref, b2_ref, o_ref):
    # x_ref / o_ref : (1, C, HW)   NCHW with spatial flattened onto lanes
    # w1_ref        : (Cr, C)      squeeze 1x1-conv weight
    # b1_ref        : (Cr, 1)
    # w2_ref        : (C, Cr)      excite 1x1-conv weight
    # b2_ref        : (C, 1)
    x = x_ref[0]                                        # (C, HW), f32
    hw = x.shape[1]

    # Global average pool over the spatial (lane) axis -> per-channel mean.
    # Cross-lane reduce goes to the XLU; the 1/HW scale is a compile-time
    # constant (no divide).
    m = jnp.sum(x, axis=1, keepdims=True) * (1.0 / float(hw))   # (C, 1)

    # FC1 + ReLU.  Column-vector orientation keeps the result channel-major,
    # so the final gate broadcasts straight across lanes with no transpose.
    h = jnp.dot(w1_ref[...], m, preferred_element_type=jnp.float32) + b1_ref[...]
    h = jnp.maximum(h, 0.0)                             # (Cr, 1)

    # FC2 + sigmoid -> per-channel gate (sigmoid lowers to the EUP slot).
    g = jnp.dot(w2_ref[...], h, preferred_element_type=jnp.float32) + b2_ref[...]
    g = jax.nn.sigmoid(g)                               # (C, 1)

    # Channel-wise rescale, broadcast over all spatial positions (lanes).
    # HW is a multiple of 128 at the test shape -> unmasked lane-dense store.
    o_ref[0] = x * g


def se_block(x_nchw, w1, b1, w2, b2):
    """Squeeze-excitation in NCHW.

    x_nchw : (N, C, H, W) float32
    w1     : (Cr, C, 1, 1)  (PyTorch Conv2d k=1 weight)   b1 : (Cr,)
    w2     : (C, Cr, 1, 1)                                 b2 : (C,)
    """
    N, C, H, W = x_nchw.shape
    Cr = w1.shape[0]
    HW = H * W

    x2 = x_nchw.reshape(N, C, HW)          # contiguous merge -> free reshape
    w1m = w1.reshape(Cr, C)
    w2m = w2.reshape(C, Cr)

    # Mem-bound cost hint for the XLA scheduler around the custom call.
    cost = pl.CostEstimate(
        flops=2 * N * C * HW + 2 * N * (Cr * C + C * Cr),
        transcendentals=N * C,                      # sigmoid per channel
        bytes_accessed=2 * N * C * HW * 4 + (Cr * C + C * Cr + Cr + C) * 4,
    )

    out = pl.pallas_call(
        _se_kernel,
        out_shape=jax.ShapeDtypeStruct((N, C, HW), jnp.float32),
        grid=(N,),
        in_specs=[
            # Blocks span the full (C, HW) plane, so the (8,128) divisibility
            # rule is satisfied for any C/HW (block == full array dims).
            pl.BlockSpec((1, C, HW), lambda n: (n, 0, 0)),
            pl.BlockSpec((Cr, C), lambda n: (0, 0)),
            pl.BlockSpec((Cr, 1), lambda n: (0, 0)),
            pl.BlockSpec((C, Cr), lambda n: (0, 0)),
            pl.BlockSpec((C, 1), lambda n: (0, 0)),
        ],
        out_specs=pl.BlockSpec((1, C, HW), lambda n: (n, 0, 0)),
        compiler_params=pltpu.CompilerParams(
            dimension_semantics=("parallel",),   # batch -> 2 TCs on v7x
        ),
        cost_estimate=cost,
    )(x2, w1m, b1.reshape(Cr, 1), w2m, b2.reshape(C, 1))

    return out.reshape(N, C, H, W)


# --------------------------------------------------------------------------
# Parameter init + pure-JAX reference (for a correctness check)
# --------------------------------------------------------------------------
def init_se_params(key, in_channels, reduction=16):
    cr = in_channels // reduction
    k1, k2, k3, k4 = jax.random.split(key, 4)
    s = 0.05
    return {
        "w1": (s * jax.random.normal(k1, (cr, in_channels, 1, 1))).astype(jnp.float32),
        "b1": (s * jax.random.normal(k2, (cr,))).astype(jnp.float32),
        "w2": (s * jax.random.normal(k3, (in_channels, cr, 1, 1))).astype(jnp.float32),
        "b2": (s * jax.random.normal(k4, (in_channels,))).astype(jnp.float32),
    }


def se_reference(params, x):
    N, C, H, W = x.shape
    w1 = params["w1"].reshape(-1, C)
    w2 = params["w2"].reshape(C, -1)
    m = jnp.mean(x, axis=(2, 3))                               # (N, C)
    h = jnp.maximum(m @ w1.T + params["b1"], 0.0)              # (N, Cr)
    g = jax.nn.sigmoid(h @ w2.T + params["b2"])                # (N, C)
    return x * g[:, :, None, None]


def se_forward(params, x_nchw):
    return se_block(x_nchw, params["w1"], params["b1"], params["w2"], params["b2"])


if __name__ == "__main__":
    key = jax.random.PRNGKey(0)
    kp, kx = jax.random.split(key)

    # reduction=16 requires C >= 16; use C=64 -> Cr=4 (small but valid).
    N, C, H, W = 2, 64, 16, 16
    params = init_se_params(kp, C, reduction=16)
    x = jax.random.normal(kx, (N, C, H, W), jnp.float32)

    fwd = jax.jit(se_forward)
    out = jax.block_until_ready(fwd(params, x))

    assert out.shape == (N, C, H, W), out.shape
    assert out.dtype == jnp.float32

    ref = se_reference(params, x)
    max_err = float(jnp.max(jnp.abs(out - ref)))
    assert jnp.allclose(out, ref, atol=1e-4, rtol=1e-4), max_err

    print("KERNEL_OK")
</pallas_src>

<mosaic_0001>
module attributes {stable_mosaic.version = 11 : i64} {
  func.func @_se_kernel(%arg0: i32, %arg1: memref<1x64x256xf32, #tpu.memory_space<vmem>>, %arg2: memref<4x64xf32, #tpu.memory_space<vmem>>, %arg3: memref<4x1xf32, #tpu.memory_space<vmem>>, %arg4: memref<64x4xf32, #tpu.memory_space<vmem>>, %arg5: memref<64x1xf32, #tpu.memory_space<vmem>>, %arg6: memref<1x64x256xf32, #tpu.memory_space<vmem>>) attributes {dimension_semantics = [#tpu.dimension_semantics<parallel>], iteration_bounds = array<i64: 2>, scalar_prefetch = 0 : i64, scratch_operands = 0 : i64, tpu.core_type = #tpu.core_type<tc>, window_params = [{transform_indices = @transform_0, window_bounds = array<i64: 1, 64, 256>}, {pipeline_mode = #tpu.pipeline_mode<synchronous>, transform_indices = @transform_1, window_bounds = array<i64: 4, 64>}, {pipeline_mode = #tpu.pipeline_mode<synchronous>, transform_indices = @transform_2, window_bounds = array<i64: 4, 1>}, {pipeline_mode = #tpu.pipeline_mode<synchronous>, transform_indices = @transform_3, window_bounds = array<i64: 64, 4>}, {pipeline_mode = #tpu.pipeline_mode<synchronous>, transform_indices = @transform_4, window_bounds = array<i64: 64, 1>}, {transform_indices = @transform_5, window_bounds = array<i64: 1, 64, 256>}]} {
    %c0 = arith.constant 0 : index
    %c0_0 = arith.constant 0 : index
    %c0_1 = arith.constant 0 : index
    %0 = vector.load %arg1[%c0, %c0_0, %c0_1] : memref<1x64x256xf32, #tpu.memory_space<vmem>>, vector<1x64x256xf32>
    %1 = vector.shape_cast %0 : vector<1x64x256xf32> to vector<64x256xf32>
    %cst = arith.constant dense<0.000000e+00> : vector<64xf32>
    %2 = vector.multi_reduction <add>, %1, %cst [1] : vector<64x256xf32> to vector<64xf32>
    %3 = vector.shape_cast %2 : vector<64xf32> to vector<64x1xf32>
    %cst_2 = arith.constant 3.906250e-03 : f32
    %4 = vector.broadcast %cst_2 : f32 to vector<64x1xf32>
    %5 = arith.mulf %3, %4 : vector<64x1xf32>
    %c0_3 = arith.constant 0 : index
    %c0_4 = arith.constant 0 : index
    %6 = vector.load %arg2[%c0_3, %c0_4] : memref<4x64xf32, #tpu.memory_space<vmem>>, vector<4x64xf32>
    %cst_5 = arith.constant dense<0.000000e+00> : vector<4x1xf32>
    %7 = tpu.matmul %6, %5, %cst_5 {dimension_numbers = #tpu.dot_dimension_numbers<[1], [0], [0], [1], [0, 0, 1, 1], [], []>} : vector<4x64xf32>, vector<64x1xf32>, vector<4x1xf32> -> vector<4x1xf32>
    %c0_6 = arith.constant 0 : index
    %c0_7 = arith.constant 0 : index
    %8 = vector.load %arg3[%c0_6, %c0_7] : memref<4x1xf32, #tpu.memory_space<vmem>>, vector<4x1xf32>
    %9 = arith.addf %7, %8 : vector<4x1xf32>
    %cst_8 = arith.constant 0.000000e+00 : f32
    %10 = vector.broadcast %cst_8 : f32 to vector<4x1xf32>
    %11 = arith.maximumf %9, %10 : vector<4x1xf32>
    %c0_9 = arith.constant 0 : index
    %c0_10 = arith.constant 0 : index
    %12 = vector.load %arg4[%c0_9, %c0_10] : memref<64x4xf32, #tpu.memory_space<vmem>>, vector<64x4xf32>
    %cst_11 = arith.constant dense<0.000000e+00> : vector<64x1xf32>
    %13 = tpu.matmul %12, %11, %cst_11 {dimension_numbers = #tpu.dot_dimension_numbers<[1], [0], [0], [1], [0, 0, 1, 1], [], []>} : vector<64x4xf32>, vector<4x1xf32>, vector<64x1xf32> -> vector<64x1xf32>
    %c0_12 = arith.constant 0 : index
    %c0_13 = arith.constant 0 : index
    %14 = vector.load %arg5[%c0_12, %c0_13] : memref<64x1xf32, #tpu.memory_space<vmem>>, vector<64x1xf32>
    %15 = arith.addf %13, %14 : vector<64x1xf32>
    %16 = arith.negf %15 : vector<64x1xf32>
    %17 = math.exp %16 : vector<64x1xf32>
    %cst_14 = arith.constant 1.000000e+00 : f32
    %18 = vector.broadcast %cst_14 : f32 to vector<64x1xf32>
    %19 = arith.addf %18, %17 : vector<64x1xf32>
    %20 = arith.divf %18, %19 : vector<64x1xf32>
    %21 = vector.broadcast %20 : vector<64x1xf32> to vector<64x256xf32>
    %22 = arith.mulf %1, %21 : vector<64x256xf32>
    %c0_15 = arith.constant 0 : index
    %c0_16 = arith.constant 0 : index
    %c0_17 = arith.constant 0 : index
    %23 = vector.load %arg6[%c0_15, %c0_16, %c0_17] : memref<1x64x256xf32, #tpu.memory_space<vmem>>, vector<1x64x256xf32>
    %24 = vector.shape_cast %23 : vector<1x64x256xf32> to vector<64x256xf32>
    %25 = vector.shape_cast %22 : vector<64x256xf32> to vector<1x64x256xf32>
    tpu.vector_store %arg6[%c0_15, %c0_16, %c0_17], %25 {strides = array<i32>} : memref<1x64x256xf32, #tpu.memory_space<vmem>>, vector<1x64x256xf32>,
    return
  }
  func.func @transform_0(%arg0: i32) -> (i32, i32, i32) {
    %c0_i32 = arith.constant 0 : i32
    %c0_i32_0 = arith.constant 0 : i32
    %c0_i32_1 = arith.constant 0 : i32
    return %arg0, %c0_i32, %c0_i32_0 : i32, i32, i32
  }
  func.func @transform_1(%arg0: i32) -> (i32, i32) {
    %c0_i32 = arith.constant 0 : i32
    %c0_i32_0 = arith.constant 0 : i32
    %c0_i32_1 = arith.constant 0 : i32
    return %c0_i32, %c0_i32_0 : i32, i32
  }
  func.func @transform_2(%arg0: i32) -> (i32, i32) {
    %c0_i32 = arith.constant 0 : i32
    %c0_i32_0 = arith.constant 0 : i32
    %c0_i32_1 = arith.constant 0 : i32
    return %c0_i32, %c0_i32_0 : i32, i32
  }
  func.func @transform_3(%arg0: i32) -> (i32, i32) {
    %c0_i32 = arith.constant 0 : i32
    %c0_i32_0 = arith.constant 0 : i32
    %c0_i32_1 = arith.constant 0 : i32
    return %c0_i32, %c0_i32_0 : i32, i32
  }
  func.func @transform_4(%arg0: i32) -> (i32, i32) {
    %c0_i32 = arith.constant 0 : i32
    %c0_i32_0 = arith.constant 0 : i32
    %c0_i32_1 = arith.constant 0 : i32
    return %c0_i32, %c0_i32_0 : i32, i32
  }
  func.func @transform_5(%arg0: i32) -> (i32, i32, i32) {
    %c0_i32 = arith.constant 0 : i32
    %c0_i32_0 = arith.constant 0 : i32
    %c0_i32_1 = arith.constant 0 : i32
    return %arg0, %c0_i32, %c0_i32_0 : i32, i32, i32
  }
}

</mosaic_0001>

<llo_original>
// kernel: se_forward.1
$region0: #{se_forward.1}
  #allocation0 [shape = 'u32[]', space=smem, size = 0x4, offset = 0x4, fixed_abs, tag = 'smem constant byte address 0x4 - core index']
  #allocation1 [shape = 'u32[144,128]{1,0:T(1,128)}', space=vmem, size = 0x12000, scoped, tag = 'internal scratch']
  %s0 = inlined_call_operand.vmem [shape: f32[2,64,256], index: 0, kind: input, shape index: {}]
  %s1 = inlined_call_operand.vmem [shape: f32[4,64], index: 1, kind: input, shape index: {}]
  %s2 = inlined_call_operand.vmem [shape: f32[4,1], index: 2, kind: input, shape index: {}]
  %s3 = inlined_call_operand.vmem [shape: f32[64,4], index: 3, kind: input, shape index: {}]
  %s4 = inlined_call_operand.vmem [shape: f32[64,1], index: 4, kind: input, shape index: {}]
  %s5 = inlined_call_operand.vmem [shape: f32[2,64,256], index: 5, kind: output, shape index: {}]
  %s6 = sld [smem:[#allocation0]]
  $region53: #{se_forward.1} parent=0
    _
  %s8 = ssub.s32 1, %s6
  %s9 = scalar_select 0, %s8, %s6
  loop: start=0, step=1, limit=4
  $region2: #{se_forward.1} parent=0 // loop_pre_header
    _
  $region3: #{se_forward.1} parent=0 // loop_header
    %s11 = sphi 0, %s15
    %p12 = scmp.ge.s32.totalorder %s11, 4
    %s21 = sphi 0, %s23
    %s24 = sphi 0, %s21
    %s25 = sphi 0, %s24
    %s41 = sphi 0, %s25
    %s45 = sphi 0, %s45
    %s47 = sphi 0, %s45
    %s48 = sphi 0, %s47
    %s62 = sphi 0, %s48
    %s66 = sphi 0, %s66
    %s68 = sphi 0, %s66
    %s69 = sphi 0, %s68
    %s83 = sphi 0, %s69
    %s87 = sphi 0, %s87
    %s89 = sphi 0, %s87
    %s90 = sphi 0, %s89
    %s104 = sphi 0, %s90
    %s108 = sphi 0, %s108
    %s110 = sphi 0, %s108
    %s111 = sphi 0, %s110
    %s125 = sphi 0, %s111
    %s131 = sphi 0, %s133
    %s134 = sphi 0, %s131
    %s135 = sphi 0, %s134
    %s151 = sphi 0, %s135
  $region4: #{se_forward.1} parent=0 // loop_header_branch
    %14 = sbr.rel (%p12) target = $region8
  $region5: #{se_forward.1} parent=0 // loop_body
    %s16 = ssub.s32 %s11, 1
    %s17 = ssub.s32 %s11, 2
    %s18 = sadd.s32 %s11, 1
    %s19 = ssub.s32 %s11, %s18
    %p20 = scmp.eq.s32.totalorder %s19, 0
    %s22 = sadd.s32 %s21, 1
    %s23 = scalar_select %p20, %s21, %s22
    %p26 = pneg %p20
    %p27 = scmp.eq.s32.totalorder %s11, 1
    %p28 = por %p26, %p27
    %p29 = scmp.ne.s32.totalorder %s21, %s24
    %p30 = scmp.eq.s32.totalorder %s11, 0
    %p31 = por %p29, %p30
    %p32 = scmp.ne.s32.totalorder %s21, %s24
    %p33 = scmp.eq.s32.totalorder %s16, 1
    %p34 = por %p32, %p33
    %p35 = scmp.ne.s32.totalorder %s24, %s25
    %p36 = scmp.eq.s32.totalorder %s16, 0
    %p37 = por %p35, %p36
    %p38 = scmp.ne.s32.totalorder %s24, %s25
    %p39 = scmp.eq.s32.totalorder %s17, 1
    %p40 = por %p38, %p39
    %p42 = scmp.ne.s32.totalorder %s25, %s41
    %p43 = scmp.eq.s32.totalorder %s17, 0
    %p44 = por %p42, %p43
    %s46 = sadd.s32 %s45, 1
    %p49 = scmp.eq.s32.totalorder %s11, 1
    %p50 = scmp.ne.s32.totalorder %s45, %s47
    %p51 = scmp.eq.s32.totalorder %s11, 0
    %p52 = por %p50, %p51
    %p53 = scmp.ne.s32.totalorder %s45, %s47
    %p54 = scmp.eq.s32.totalorder %s16, 1
    %p55 = por %p53, %p54
    %p56 = scmp.ne.s32.totalorder %s47, %s48
    %p57 = scmp.eq.s32.totalorder %s16, 0
    %p58 = por %p56, %p57
    %p59 = scmp.ne.s32.totalorder %s47, %s48
    %p60 = scmp.eq.s32.totalorder %s17, 1
    %p61 = por %p59, %p60
    %p63 = scmp.ne.s32.totalorder %s48, %s62
    %p64 = scmp.eq.s32.totalorder %s17, 0
    %p65 = por %p63, %p64
    %s67 = sadd.s32 %s66, 1
    %p70 = scmp.eq.s32.totalorder %s11, 1
    %p71 = scmp.ne.s32.totalorder %s66, %s68
    %p72 = scmp.eq.s32.totalorder %s11, 0
    %p73 = por %p71, %p72
    %p74 = scmp.ne.s32.totalorder %s66, %s68
    %p75 = scmp.eq.s32.totalorder %s16, 1
    %p76 = por %p74, %p75
    %p77 = scmp.ne.s32.totalorder %s68, %s69
    %p78 = scmp.eq.s32.totalorder %s16, 0
    %p79 = por %p77, %p78
    %p80 = scmp.ne.s32.totalorder %s68, %s69
    %p81 = scmp.eq.s32.totalorder %s17, 1
    %p82 = por %p80, %p81
    %p84 = scmp.ne.s32.totalorder %s69, %s83
    %p85 = scmp.eq.s32.totalorder %s17, 0
    %p86 = por %p84, %p85
    %s88 = sadd.s32 %s87, 1
    %p91 = scmp.eq.s32.totalorder %s11, 1
    %p92 = scmp.ne.s32.totalorder %s87, %s89
    %p93 = scmp.eq.s32.totalorder %s11, 0
    %p94 = por %p92, %p93
    %p95 = scmp.ne.s32.totalorder %s87, %s89
    %p96 = scmp.eq.s32.totalorder %s16, 1
    %p97 = por %p95, %p96
    %p98 = scmp.ne.s32.totalorder %s89, %s90
    %p99 = scmp.eq.s32.totalorder %s16, 0
    %p100 = por %p98, %p99
    %p101 = scmp.ne.s32.totalorder %s89, %s90
    %p102 = scmp.eq.s32.totalorder %s17, 1
    %p103 = por %p101, %p102
    %p105 = scmp.ne.s32.totalorder %s90, %s104
    %p106 = scmp.eq.s32.totalorder %s17, 0
    %p107 = por %p105, %p106
    %s109 = sadd.s32 %s108, 1
    %p112 = scmp.eq.s32.totalorder %s11, 1
    %p113 = scmp.ne.s32.totalorder %s108, %s110
    %p114 = scmp.eq.s32.totalorder %s11, 0
    %p115 = por %p113, %p114
    %p116 = scmp.ne.s32.totalorder %s108, %s110
    %p117 = scmp.eq.s32.totalorder %s16, 1
    %p118 = por %p116, %p117
    %p119 = scmp.ne.s32.totalorder %s110, %s111
    %p120 = scmp.eq.s32.totalorder %s16, 0
    %p121 = por %p119, %p120
    %p122 = scmp.ne.s32.totalorder %s110, %s111
    %p123 = scmp.eq.s32.totalorder %s17, 1
    %p124 = por %p122, %p123
    %p126 = scmp.ne.s32.totalorder %s111, %s125
    %p127 = scmp.eq.s32.totalorder %s17, 0
    %p128 = por %p126, %p127
    %s129 = ssub.s32 %s11, %s18
    %p130 = scmp.eq.s32.totalorder %s129, 0
    %s132 = sadd.s32 %s131, 1
    %s133 = scalar_select %p130, %s131, %s132
    %p136 = pneg %p130
    %p137 = scmp.eq.s32.totalorder %s11, 1
    %p138 = por %p136, %p137
    %p139 = scmp.ne.s32.totalorder %s131, %s134
    %p140 = scmp.eq.s32.totalorder %s11, 0
    %p141 = por %p139, %p140
    %p142 = scmp.ne.s32.totalorder %s131, %s134
    %p143 = scmp.eq.s32.totalorder %s16, 1
    %p144 = por %p142, %p143
    %p145 = scmp.ne.s32.totalorder %s134, %s135
    %p146 = scmp.eq.s32.totalorder %s16, 0
    %p147 = por %p145, %p146
    %p148 = scmp.ne.s32.totalorder %s134, %s135
    %p149 = scmp.eq.s32.totalorder %s17, 1
    %p150 = por %p148, %p149
    %p152 = scmp.ne.s32.totalorder %s135, %s151
    %p153 = scmp.eq.s32.totalorder %s17, 0
    %p154 = por %p152, %p153
    %p155 = scmp.le.s32.totalorder 1, %s11
    %p156 = scmp.lt.s32.totalorder %s11, 3
    %p157 = pnand %p155, %p156
    %p158 = pneg %p157
    // Predicated region
    $region9: #{se_forward.1} parent=5 // pred_check
      _
    $region10: #{se_forward.1} parent=5 // pred_check_branch
      %160 = sbr.rel (%p157) target = $region12
    $region11: #{se_forward.1} parent=5 // pred_region
      %s161 = ssub.s32 %s11, 1
      // Predicated region
      $region13: #{se_forward.1} parent=11 // pred_check
        %p162 = pneg %p58
      $region14: #{se_forward.1} parent=11 // pred_check_branch
        %164 = sbr.rel (%p162) target = $region16
      $region15: #{se_forward.1} parent=11 // pred_region
        _
      $region16: #{se_forward.1} parent=11 // pred_fallthru
        _
      // Predicated region
      $region17: #{se_forward.1} parent=11 // pred_check
        %p165 = pneg %p79
      $region18: #{se_forward.1} parent=11 // pred_check_branch
        %167 = sbr.rel (%p165) target = $region20
      $region19: #{se_forward.1} parent=11 // pred_region
        _
      $region20: #{se_forward.1} parent=11 // pred_fallthru
        _
      // Predicated region
      $region21: #{se_forward.1} parent=11 // pred_check
        %p168 = pneg %p100
      $region22: #{se_forward.1} parent=11 // pred_check_branch
        %170 = sbr.rel (%p168) target = $region24
      $region23: #{se_forward.1} parent=11 // pred_region
        _
      $region24: #{se_forward.1} parent=11 // pred_fallthru
        _
      // Predicated region
      $region25: #{se_forward.1} parent=11 // pred_check
        %p171 = pneg %p121
      $region26: #{se_forward.1} parent=11 // pred_check_branch
        %173 = sbr.rel (%p171) target = $region28
      $region27: #{se_forward.1} parent=11 // pred_region
        _
      $region28: #{se_forward.1} parent=11 // pred_fallthru
        _
    $region12: #{se_forward.1} parent=5 // pred_fallthru
      _
    %p174 = scmp.lt.s32.totalorder %s11, 2
    // Predicated region
    $region29: #{se_forward.1} parent=5 // pred_check
      %p175 = pneg %p174
    $region30: #{se_forward.1} parent=5 // pred_check_branch
      %177 = sbr.rel (%p175) target = $region32
    $region31: #{se_forward.1} parent=5 // pred_region
      // Predicated region
      $region33: #{se_forward.1} parent=31 // pred_check
        %p178 = pneg %p31
      $region34: #{se_forward.1} parent=31 // pred_check_branch
        %180 = sbr.rel (%p178) target = $region36
      $region35: #{se_forward.1} parent=31 // pred_region
        %p181 = scmp.lt.s32.totalorder %s11, 1
        %s182 = scalar_select %p181, %s11, 1
        %s183 = smul.addr %s182, 16
        %s184 = smul.addr %s183, 8
        %s185 = scalar_lea.vmem %s0, %s184
      $region36: #{se_forward.1} parent=31 // pred_fallthru
        _
    $region32: #{se_forward.1} parent=5 // pred_fallthru
      _
    %p186 = scmp.le.s32.totalorder 1, %s11
    %p187 = scmp.lt.s32.totalorder %s11, 3
    %p188 = pnand %p186, %p187
    %p189 = pneg %p188
    // Predicated region
    $region37: #{se_forward.1} parent=5 // pred_check
      _
    $region38: #{se_forward.1} parent=5 // pred_check_branch
      %191 = sbr.rel (%p188) target = $region40
    $region39: #{se_forward.1} parent=5 // pred_region
      %s192 = ssub.s32 %s11, 1
      %p193 = scmp.lt.s32.totalorder %s16, 1
      %s194 = scalar_select %p193, %s16, 1
      %s195 = smul.addr %s194, 16
      %s196 = smul.addr %s195, 8
      %s197 = scalar_lea.vmem %s0, %s196
      %p198 = pneg %p37
      %p199 = pneg %p34
      %p200 = pneg %p58
      %p201 = pneg %p55
      %p202 = pneg %p79
      %p203 = pneg %p76
      %p204 = pneg %p100
      %p205 = pneg %p97
      %p206 = pneg %p121
      %p207 = pneg %p118
      %p208 = pneg %p147
      %p209 = pneg %p144
      %p210 = scmp.lt.s32.totalorder %s16, 1
      %s211 = scalar_select %p210, %s16, 1
      %s212 = smul.addr %s211, 16
      %s213 = smul.addr %s212, 8
      %s214 = scalar_lea.vmem %s5, %s213
      %p215 = scmp.lt.s32.totalorder %s16, 1
      %s216 = scalar_select %p215, %s16, 1
      %s217 = smul.addr %s216, 16
      %s218 = smul.addr %s217, 8
      %s219 = scalar_lea.vmem %s0, %s218
      %p220 = scmp.lt.s32.totalorder %s16, 1
      %s221 = scalar_select %p220, %s16, 1
      %s222 = smul.addr %s221, 16
      %s223 = smul.addr %s222, 8
      %s224 = scalar_lea.vmem %s5, %s223
      %v225 = vld [vmem:[%s219] sm:$0xff]
      %v226 = vld [vmem:[%s219 + $0x8] sm:$0xff]
      %v227 = vld [vmem:[%s219 + $0x10] sm:$0xff]
      %v228 = vld [vmem:[%s219 + $0x18] sm:$0xff]
      %v229 = vld [vmem:[%s219 + $0x20] sm:$0xff]
      %v230 = vld [vmem:[%s219 + $0x28] sm:$0xff]
      %v231 = vld [vmem:[%s219 + $0x30] sm:$0xff]
      %v232 = vld [vmem:[%s219 + $0x38] sm:$0xff]
      %v233 = vld [vmem:[%s219 + $0x40] sm:$0xff]
      %v234 = vld [vmem:[%s219 + $0x48] sm:$0xff]
      %v235 = vld [vmem:[%s219 + $0x50] sm:$0xff]
      %v236 = vld [vmem:[%s219 + $0x58] sm:$0xff]
      %v237 = vld [vmem:[%s219 + $0x60] sm:$0xff]
      %v238 = vld [vmem:[%s219 + $0x68] sm:$0xff]
      %v239 = vld [vmem:[%s219 + $0x70] sm:$0xff]
      %v240 = vld [vmem:[%s219 + $0x78] sm:$0xff]
      %v241 = vadd.f32 %v225, %v226
      %242 = vadd.xlane.f32.xlu0 %v241
      %v243 = vpop.xlane.xlu0 %242
      %v244 = vadd.f32 %v227, %v228
      %245 = vadd.xlane.f32.xlu0 %v244
      %v246 = vpop.xlane.xlu0 %245
      %v247 = vadd.f32 %v229, %v230
      %248 = vadd.xlane.f32.xlu0 %v247
      %v249 = vpop.xlane.xlu0 %248
      %v250 = vadd.f32 %v231, %v232
      %251 = vadd.xlane.f32.xlu0 %v250
      %v252 = vpop.xlane.xlu0 %251
      %v253 = vadd.f32 %v233, %v234
      %254 = vadd.xlane.f32.xlu0 %v253
      %v255 = vpop.xlane.xlu0 %254
      %v256 = vadd.f32 %v235, %v236
      %257 = vadd.xlane.f32.xlu0 %v256
      %v258 = vpop.xlane.xlu0 %257
      %v259 = vadd.f32 %v237, %v238
      %260 = vadd.xlane.f32.xlu0 %v259
      %v261 = vpop.xlane.xlu0 %260
      %v262 = vadd.f32 %v239, %v240
      %263 = vadd.xlane.f32.xlu0 %v262
      %v264 = vpop.xlane.xlu0 %263
      %v265 = vmul.f32 %v243, 0.00390625
      %v266 = vmul.f32 %v246, 0.00390625
      %v267 = vmul.f32 %v249, 0.00390625
      %v268 = vmul.f32 %v252, 0.00390625
      %v269 = vmul.f32 %v255, 0.00390625
      %v270 = vmul.f32 %v258, 0.00390625
      %v271 = vmul.f32 %v261, 0.00390625
      %v272 = vmul.f32 %v264, 0.00390625
      %v273 = vld [vmem:[%s1] sm:$0xf]
      %v274 = vld [vmem:[%s2] sm:$0xf]
      %vm275 = vcmask 523264
      %v277 = vsel %vm275, %v273, 0
      %279 = vmatprep.subr.mxu0 0.0
      %280 = vmatpush1.msra.mxu0 0.0
      %281 = vmatprep.subr.mxu0 0.0
      %282 = vmatpush1.msra.mxu0 0.0
      %283 = vmatprep.subr.mxu0 0.0
      %284 = vmatpush1.msra.mxu0 0.0
      %285 = vmatprep.subr.mxu0 0.0
      %286 = vmatpush1.msra.mxu0 0.0
      %287 = vmatprep.subr.mxu0 0.0
      %288 = vmatpush1.msra.mxu0 0.0
      %289 = vmatprep.subr.mxu0 0.0
      %290 = vmatpush1.msra.mxu0 0.0
      %291 = vmatprep.subr.mxu0 0.0
      %292 = vmatpush1.msra.mxu0 0.0
      %293 = vmatprep.subr.mxu0 0.0
      %294 = vmatpush1.msra.mxu0 0.0
      %295 = vmatprep.subr.mxu0 0.0
      %296 = vmatpush1.msra.mxu0 %v272
      %297 = vmatprep.subr.mxu0 0.0
      %298 = vmatpush1.msra.mxu0 %v271
      %299 = vmatprep.subr.mxu0 0.0
      %300 = vmatpush1.msra.mxu0 %v270
      %301 = vmatprep.subr.mxu0 0.0
      %302 = vmatpush1.msra.mxu0 %v269
      %303 = vmatprep.subr.mxu0 0.0
      %304 = vmatpush1.msra.mxu0 %v268
      %305 = vmatprep.subr.mxu0 0.0
      %306 = vmatpush1.msra.mxu0 %v267
      %307 = vmatprep.subr.mxu0 0.0
      %308 = vmatpush1.msra.mxu0 %v266
      %309 = vmatprep.subr.mxu0 0.0
      %310 = vmatpush1.msra.mxu0 %v265
      %311 = vmatprep.subr.mxu0 0.0
      %312 = vmatpush2.msra.mxu0 0.0
      %313 = vmatprep.subr.mxu0 0.0
      %314 = vmatpush2.msra.mxu0 0.0
      %315 = vmatprep.subr.mxu0 0.0
      %316 = vmatpush2.msra.mxu0 0.0
      %317 = vmatprep.subr.mxu0 0.0
      %318 = vmatpush2.msra.mxu0 0.0
      %319 = vmatprep.subr.mxu0 0.0
      %320 = vmatpush2.msra.mxu0 0.0
      %321 = vmatprep.subr.mxu0 0.0
      %322 = vmatpush2.msra.mxu0 0.0
      %323 = vmatprep.subr.mxu0 0.0
      %324 = vmatpush2.msra.mxu0 0.0
      %325 = vmatprep.subr.mxu0 0.0
      %326 = vmatpush2.msra.mxu0 0.0
      %327 = vmatprep.subr.mxu0 0.0
      %328 = vmatpush2.msra.mxu0 0.0
      %329 = vmatprep.subr.mxu0 0.0
      %330 = vmatpush2.msra.mxu0 0.0
      %331 = vmatprep.subr.mxu0 0.0
      %332 = vmatpush2.msra.mxu0 0.0
      %333 = vmatprep.subr.mxu0 0.0
      %334 = vmatpush2.msra.mxu0 0.0
      %335 = vmatprep.subr.mxu0 0.0
      %336 = vmatpush2.msra.mxu0 0.0
      %337 = vmatprep.subr.mxu0 0.0
      %338 = vmatpush2.msra.mxu0 0.0
      %339 = vmatprep.subr.mxu0 0.0
      %340 = vmatpush2.msra.mxu0 0.0
      %341 = vmatprep.subr.mxu0 0.0
      %342 = vmatpush2.msra.mxu0 0.0
      %343 = vmatprep.mubr.f32.mxu0 0.0
      %344 = vmatmul.mubr.f32.gmra.mxu0 %v277
      %v345 = vpop.f32.mrf.mxu0
      %v346 = vadd.f32 %v274, %v345
      %v347 = vpop.f32.mrf.mxu0
      %348 = vdwg.mxu0
      %v349 = vmax.f32 %v346, 0.0
      %v350 = vld [vmem:[%s3] sm:$0xff]
      %v351 = vld [vmem:[%s3 + $0x8] sm:$0xff]
      %v352 = vld [vmem:[%s3 + $0x10] sm:$0xff]
      %v353 = vld [vmem:[%s3 + $0x18] sm:$0xff]
      %v354 = vld [vmem:[%s3 + $0x20] sm:$0xff]
      %v355 = vld [vmem:[%s3 + $0x28] sm:$0xff]
      %v356 = vld [vmem:[%s3 + $0x30] sm:$0xff]
      %v357 = vld [vmem:[%s3 + $0x38] sm:$0xff]
      %v358 = vld [vmem:[%s4] sm:$0xff]
      %v359 = vld [vmem:[%s4 + $0x8] sm:$0xff]
      %v360 = vld [vmem:[%s4 + $0x10] sm:$0xff]
      %v361 = vld [vmem:[%s4 + $0x18] sm:$0xff]
      %v362 = vld [vmem:[%s4 + $0x20] sm:$0xff]
      %v363 = vld [vmem:[%s4 + $0x28] sm:$0xff]
      %v364 = vld [vmem:[%s4 + $0x30] sm:$0xff]
      %v365 = vld [vmem:[%s4 + $0x38] sm:$0xff]
      %vm366 = vcmask 31744
      %v368 = vsel %vm366, %v350, 0
      %v371 = vsel %vm366, %v351, 0
      %v374 = vsel %vm366, %v352, 0
      %v377 = vsel %vm366, %v353, 0
      %v380 = vsel %vm366, %v354, 0
      %v383 = vsel %vm366, %v355, 0
      %v386 = vsel %vm366, %v356, 0
      %v389 = vsel %vm366, %v357, 0
      %vm391 = vcmask 1043456
      %v393 = vsel %vm391, %v349, 0
      %395 = vmatprep.subr.mxu0 0.0
      %396 = vmatpush1.msra.mxu0 0.0
      %397 = vmatprep.subr.mxu0 0.0
      %398 = vmatpush1.msra.mxu0 0.0
      %399 = vmatprep.subr.mxu0 0.0
      %400 = vmatpush1.msra.mxu0 0.0
      %401 = vmatprep.subr.mxu0 0.0
      %402 = vmatpush1.msra.mxu0 0.0
      %403 = vmatprep.subr.mxu0 0.0
      %404 = vmatpush1.msra.mxu0 0.0
      %405 = vmatprep.subr.mxu0 0.0
      %406 = vmatpush1.msra.mxu0 0.0
      %407 = vmatprep.subr.mxu0 0.0
      %408 = vmatpush1.msra.mxu0 0.0
      %409 = vmatprep.subr.mxu0 0.0
      %410 = vmatpush1.msra.mxu0 0.0
      %411 = vmatprep.subr.mxu0 0.0
      %412 = vmatpush1.msra.mxu0 0.0
      %413 = vmatprep.subr.mxu0 0.0
      %414 = vmatpush1.msra.mxu0 0.0
      %415 = vmatprep.subr.mxu0 0.0
      %416 = vmatpush1.msra.mxu0 0.0
      %417 = vmatprep.subr.mxu0 0.0
      %418 = vmatpush1.msra.mxu0 0.0
      %419 = vmatprep.subr.mxu0 0.0
      %420 = vmatpush1.msra.mxu0 0.0
      %421 = vmatprep.subr.mxu0 0.0
      %422 = vmatpush1.msra.mxu0 0.0
      %423 = vmatprep.subr.mxu0 0.0
      %424 = vmatpush1.msra.mxu0 0.0
      %425 = vmatprep.subr.mxu0 0.0
      %426 = vmatpush1.msra.mxu0 %v393
      %427 = vmatprep.subr.mxu0 0.0
      %428 = vmatpush2.msra.mxu0 0.0
      %429 = vmatprep.subr.mxu0 0.0
      %430 = vmatpush2.msra.mxu0 0.0
      %431 = vmatprep.subr.mxu0 0.0
      %432 = vmatpush2.msra.mxu0 0.0
      %433 = vmatprep.subr.mxu0 0.0
      %434 = vmatpush2.msra.mxu0 0.0
      %435 = vmatprep.subr.mxu0 0.0
      %436 = vmatpush2.msra.mxu0 0.0
      %437 = vmatprep.subr.mxu0 0.0
      %438 = vmatpush2.msra.mxu0 0.0
      %439 = vmatprep.subr.mxu0 0.0
      %440 = vmatpush2.msra.mxu0 0.0
      %441 = vmatprep.subr.mxu0 0.0
      %442 = vmatpush2.msra.mxu0 0.0
      %443 = vmatprep.subr.mxu0 0.0
      %444 = vmatpush2.msra.mxu0 0.0
      %445 = vmatprep.subr.mxu0 0.0
      %446 = vmatpush2.msra.mxu0 0.0
      %447 = vmatprep.subr.mxu0 0.0
      %448 = vmatpush2.msra.mxu0 0.0
      %449 = vmatprep.subr.mxu0 0.0
      %450 = vmatpush2.msra.mxu0 0.0
      %451 = vmatprep.subr.mxu0 0.0
      %452 = vmatpush2.msra.mxu0 0.0
      %453 = vmatprep.subr.mxu0 0.0
      %454 = vmatpush2.msra.mxu0 0.0
      %455 = vmatprep.subr.mxu0 0.0
      %456 = vmatpush2.msra.mxu0 0.0
      %457 = vmatprep.subr.mxu0 0.0
      %458 = vmatpush2.msra.mxu0 0.0
      %459 = vmatprep.mubr.f32.mxu0 0.0
      %460 = vmatmul.mubr.f32.gmra.mxu0 %v368
      %v461 = vpop.f32.mrf.mxu0
      %v462 = vadd.f32 %v358, %v461
      %v463 = vpop.f32.mrf.mxu0
      %464 = vmatprep.mubr.f32.mxu0 0.0
      %465 = vmatmul.mubr.f32.gmra.mxu0 %v371
      %v466 = vpop.f32.mrf.mxu0
      %v467 = vadd.f32 %v359, %v466
      %v468 = vpop.f32.mrf.mxu0
      %469 = vmatprep.mubr.f32.mxu0 0.0
      %470 = vmatmul.mubr.f32.gmra.mxu0 %v374
      %v471 = vpop.f32.mrf.mxu0
      %v472 = vadd.f32 %v360, %v471
      %v473 = vpop.f32.mrf.mxu0
      %474 = vmatprep.mubr.f32.mxu0 0.0
      %475 = vmatmul.mubr.f32.gmra.mxu0 %v377
      %v476 = vpop.f32.mrf.mxu0
      %v477 = vadd.f32 %v361, %v476
      %v478 = vpop.f32.mrf.mxu0
      %479 = vmatprep.mubr.f32.mxu0 0.0
      %480 = vmatmul.mubr.f32.gmra.mxu0 %v380
      %v481 = vpop.f32.mrf.mxu0
      %v482 = vadd.f32 %v362, %v481
      %v483 = vpop.f32.mrf.mxu0
      %484 = vmatprep.mubr.f32.mxu0 0.0
      %485 = vmatmul.mubr.f32.gmra.mxu0 %v383
      %v486 = vpop.f32.mrf.mxu0
      %v487 = vadd.f32 %v363, %v486
      %v488 = vpop.f32.mrf.mxu0
      %489 = vmatprep.mubr.f32.mxu0 0.0
      %490 = vmatmul.mubr.f32.gmra.mxu0 %v386
      %v491 = vpop.f32.mrf.mxu0
      %v492 = vadd.f32 %v364, %v491
      %v493 = vpop.f32.mrf.mxu0
      %494 = vmatprep.mubr.f32.mxu0 0.0
      %495 = vmatmul.mubr.f32.gmra.mxu0 %v389
      %v496 = vpop.f32.mrf.mxu0
      %v497 = vadd.f32 %v365, %v496
      %v498 = vpop.f32.mrf.mxu0
      %499 = vdwg.mxu0
      %v500 = vxor.u32 %v462, 2147483648
      %v501 = vxor.u32 %v467, 2147483648
      %v502 = vxor.u32 %v472, 2147483648
      %v503 = vxor.u32 %v477, 2147483648
      %v504 = vxor.u32 %v482, 2147483648
      %v505 = vxor.u32 %v487, 2147483648
      %v506 = vxor.u32 %v492, 2147483648
      %v507 = vxor.u32 %v497, 2147483648
      %v508 = vmul.f32 %v500, 1.442695
      %v509 = vpow.pop %v508
      %v510 = vmul.f32 %v501, 1.442695
      %v511 = vpow.pop %v510
      %v512 = vmul.f32 %v502, 1.442695
      %v513 = vpow.pop %v512
      %v514 = vmul.f32 %v503, 1.442695
      %v515 = vpow.pop %v514
      %v516 = vmul.f32 %v504, 1.442695
      %v517 = vpow.pop %v516
      %v518 = vmul.f32 %v505, 1.442695
      %v519 = vpow.pop %v518
      %v520 = vmul.f32 %v506, 1.442695
      %v521 = vpow.pop %v520
      %v522 = vmul.f32 %v507, 1.442695
      %v523 = vpow.pop %v522
      %v524 = vadd.f32 %v509, 1.0
      %v525 = vadd.f32 %v511, 1.0
      %v526 = vadd.f32 %v513, 1.0
      %v527 = vadd.f32 %v515, 1.0
      %v528 = vadd.f32 %v517, 1.0
      %v529 = vadd.f32 %v519, 1.0
      %v530 = vadd.f32 %v521, 1.0
      %v531 = vadd.f32 %v523, 1.0
      %v532 = vrcp.pop %v524
      %v533 = vmul.f32 1.0, %v532
      %v534 = vrcp.pop %v525
      %v535 = vmul.f32 1.0, %v534
      %v536 = vrcp.pop %v526
      %v537 = vmul.f32 1.0, %v536
      %v538 = vrcp.pop %v527
      %v539 = vmul.f32 1.0, %v538
      %v540 = vrcp.pop %v528
      %v541 = vmul.f32 1.0, %v540
      %v542 = vrcp.pop %v529
      %v543 = vmul.f32 1.0, %v542
      %v544 = vrcp.pop %v530
      %v545 = vmul.f32 1.0, %v544
      %v546 = vrcp.pop %v531
      %v547 = vmul.f32 1.0, %v546
      %549 = vset.pattern.permute.xlu0 0
      %550 = vperm.xlu0 %549, %v533
      %v551 = vpop.permute.xlu0 %550
      %554 = vset.pattern.permute.xlu0 0
      %555 = vperm.xlu0 %554, %v535
      %v556 = vpop.permute.xlu0 %555
      %559 = vset.pattern.permute.xlu0 0
      %560 = vperm.xlu0 %559, %v537
      %v561 = vpop.permute.xlu0 %560
      %564 = vset.pattern.permute.xlu0 0
      %565 = vperm.xlu0 %564, %v539
      %v566 = vpop.permute.xlu0 %565
      %569 = vset.pattern.permute.xlu0 0
      %570 = vperm.xlu0 %569, %v541
      %v571 = vpop.permute.xlu0 %570
      %574 = vset.pattern.permute.xlu0 0
      %575 = vperm.xlu0 %574, %v543
      %v576 = vpop.permute.xlu0 %575
      %579 = vset.pattern.permute.xlu0 0
      %580 = vperm.xlu0 %579, %v545
      %v581 = vpop.permute.xlu0 %580
      %584 = vset.pattern.permute.xlu0 0
      %585 = vperm.xlu0 %584, %v547
      %v586 = vpop.permute.xlu0 %585
      %v588 = vmul.f32 %v225, %v551
      %v589 = vmul.f32 %v226, %v551
      %v590 = vmul.f32 %v227, %v556
      %v591 = vmul.f32 %v228, %v556
      %v592 = vmul.f32 %v229, %v561
      %v593 = vmul.f32 %v230, %v561
      %v594 = vmul.f32 %v231, %v566
      %v595 = vmul.f32 %v232, %v566
      %v596 = vmul.f32 %v233, %v571
      %v597 = vmul.f32 %v234, %v571
      %v598 = vmul.f32 %v235, %v576
      %v599 = vmul.f32 %v236, %v576
      %v600 = vmul.f32 %v237, %v581
      %v601 = vmul.f32 %v238, %v581
      %v602 = vmul.f32 %v239, %v586
      %v603 = vmul.f32 %v240, %v586
      %604 = vst [vmem:[%s224] sm:$0xff] %v588
      %605 = vst [vmem:[%s224 + $0x8] sm:$0xff] %v589
      %606 = vst [vmem:[%s224 + $0x10] sm:$0xff] %v590
      %607 = vst [vmem:[%s224 + $0x18] sm:$0xff] %v591
      %608 = vst [vmem:[%s224 + $0x20] sm:$0xff] %v592
      %609 = vst [vmem:[%s224 + $0x28] sm:$0xff] %v593
      %610 = vst [vmem:[%s224 + $0x30] sm:$0xff] %v594
      %611 = vst [vmem:[%s224 + $0x38] sm:$0xff] %v595
      %612 = vst [vmem:[%s224 + $0x40] sm:$0xff] %v596
      %613 = vst [vmem:[%s224 + $0x48] sm:$0xff] %v597
      %614 = vst [vmem:[%s224 + $0x50] sm:$0xff] %v598
      %615 = vst [vmem:[%s224 + $0x58] sm:$0xff] %v599
      %616 = vst [vmem:[%s224 + $0x60] sm:$0xff] %v600
      %617 = vst [vmem:[%s224 + $0x68] sm:$0xff] %v601
      %618 = vst [vmem:[%s224 + $0x70] sm:$0xff] %v602
      %619 = vst [vmem:[%s224 + $0x78] sm:$0xff] %v603
      %p620 = scmp.lt.s32.totalorder %s16, 1
      %s621 = scalar_select %p620, %s16, 1
      %s622 = smul.addr %s621, 16
      %s623 = smul.addr %s622, 8
      %s624 = scalar_lea.vmem %s5, %s623
      // Predicated region
      $region41: #{se_forward.1} parent=39 // pred_check
        %p625 = pneg %p144
      $region42: #{se_forward.1} parent=39 // pred_check_branch
        %627 = sbr.rel (%p625) target = $region44
      $region43: #{se_forward.1} parent=39 // pred_region
        _
      $region44: #{se_forward.1} parent=39 // pred_fallthru
        _
    $region40: #{se_forward.1} parent=5 // pred_fallthru
      _
    %p628 = scmp.le.s32.totalorder 2, %s11
    // Predicated region
    $region45: #{se_forward.1} parent=5 // pred_check
      %p629 = pneg %p628
    $region46: #{se_forward.1} parent=5 // pred_check_branch
      %631 = sbr.rel (%p629) target = $region48
    $region47: #{se_forward.1} parent=5 // pred_region
      %s632 = ssub.s32 %s11, 2
      // Predicated region
      $region49: #{se_forward.1} parent=47 // pred_check
        %p633 = pneg %p150
      $region50: #{se_forward.1} parent=47 // pred_check_branch
        %635 = sbr.rel (%p633) target = $region52
      $region51: #{se_forward.1} parent=47 // pred_region
        %p636 = scmp.lt.s32.totalorder %s17, 1
        %s637 = scalar_select %p636, %s17, 1
        %s638 = smul.addr %s637, 16
        %s639 = smul.addr %s638, 8
        %s640 = scalar_lea.vmem %s5, %s639
      $region52: #{se_forward.1} parent=47 // pred_fallthru
        _
    $region48: #{se_forward.1} parent=5 // pred_fallthru
      _
  $region6: #{se_forward.1} parent=0 // loop_footer
    %s15 = sadd.s32 1, %s11
  $region7: #{se_forward.1} parent=0 // loop_footer_branch
    %10 = sbr.rel target = $region3
  $region8: #{se_forward.1} parent=0 // loop_exit
    _

</llo_original>
